<compile_context>
chip_gen: v6e
topology: v6e:2x2x1
jax: 0.10.0
libtpu: 0.0.40
codegen_flags: <defaults>
</compile_context>

<pallas_src>
import functools

import jax
import jax.numpy as jnp
from jax import lax
from jax.experimental import pallas as pl
from jax.experimental.pallas import tpu as pltpu

EPS = 1e-6       # torch.pairwise_distance default eps (added to the difference)
_LANE = 128
_SUBLANE = 8


def _contrastive_kernel(o1_ref, o2_ref, lbl_ref, out_ref, *,
                        margin, batch, tile, need_mask):
    # o1/o2: (tile, D) in the caller's dtype; lbl: (1, tile) f32, lane-dense.
    o1 = o1_ref[...].astype(jnp.float32)
    o2 = o2_ref[...].astype(jnp.float32)
    lbl = lbl_ref[...]                                    # (1, tile) float32

    diff = o1 - o2 + EPS                                  # torch adds eps to the diff
    d2 = jnp.sum(diff * diff, axis=-1, keepdims=True)     # (tile, 1)
    d = jnp.sqrt(d2)                                      # euclidean_distance
    hinge = jnp.maximum(margin - d, 0.0)                  # clamp(margin - d, min=0)
    h2 = hinge * hinge

    if need_mask:
        # Only generated when B % tile != 0. The OOB tail of the last block is
        # padded with garbage (possibly Inf/NaN), so use where-selects, never a
        # multiply-by-mask.
        base = pl.program_id(0) * tile
        rows = lax.broadcasted_iota(jnp.int32, (tile, 1), 0) + base
        valid_r = rows < batch
        d2 = jnp.where(valid_r, d2, 0.0)
        h2 = jnp.where(valid_r, h2, 0.0)
        lanes = lax.broadcasted_iota(jnp.int32, (1, tile), 1) + base
        lbl = jnp.where(lanes < batch, lbl, 0.0)

    # Per-block partial sum via two tiny MXU dots: bridges the lane-dense
    # (1, tile) label with the sublane-major (tile, 1) per-row values without
    # an XLU relayout, and replaces the cross-sublane scalar reduce.
    pos = jnp.dot(lbl, d2, preferred_element_type=jnp.float32)         # (1, 1)
    neg = jnp.dot(1.0 - lbl, h2, preferred_element_type=jnp.float32)   # (1, 1)
    part = pos + neg                                                    # (1, 1)

    # Lane-dense output tile (one unmasked store), wrapper reads [:, 0, 0].
    out_ref[...] = jnp.broadcast_to(part.reshape(1, 1, 1), out_ref.shape)


def _pick_batch_tile(batch, feat, itemsize):
    # Size blocks by bytes of the *padded* TPU layout (last dim lane-pads to
    # 128): target ~4 MiB per input block per buffer. 2 inputs x 2 pipeline
    # buffers x 4 MiB = 16 MiB VMEM -> fits the 32 MiB scoped budget on every
    # generation (v5e/v6e 128 MiB, v7x 64 MiB physical).
    lane_padded = ((feat + _LANE - 1) // _LANE) * _LANE
    row_bytes = lane_padded * itemsize
    target = 4 * 1024 * 1024
    tb = target // max(1, row_bytes)
    if tb >= batch:
        return batch                          # single block: full dims always legal
    tb = max(_LANE, (tb // _LANE) * _LANE)    # partial tiles: keep the (1, tb)
    if tb >= batch:                           # label block lane-aligned (x128)
        return batch
    return tb


def contrastive_loss(output1, output2, label, margin=20.0, tile_batch=None):
    B, D = output1.shape
    itemsize = jnp.dtype(output1.dtype).itemsize

    # Label travels lane-dense as (1, B): a (B, 1) f32 stream would lane-pad to
    # 128 and move ~512 bytes/row of HBM (~30% of total traffic at D=32).
    lbl = label.reshape(1, B).astype(jnp.float32)

    tb = tile_batch if tile_batch is not None else _pick_batch_tile(B, D, itemsize)
    if tb < B and (tb % _LANE != 0):
        raise ValueError("tile_batch must be a multiple of 128 when it does not "
                         "cover the whole batch")
    nblocks = pl.cdiv(B, tb)
    need_mask = (B % tb) != 0

    kernel = functools.partial(_contrastive_kernel, margin=float(margin),
                               batch=B, tile=tb, need_mask=need_mask)

    lane_padded_d = ((D + _LANE - 1) // _LANE) * _LANE
    cost = pl.CostEstimate(
        flops=B * (4 * D + 12),
        transcendentals=B,                                    # one sqrt per row
        bytes_accessed=(2 * B * lane_padded_d * itemsize      # padded input layout
                        + _SUBLANE * B * 4                    # (1, B) label stream
                        + nblocks * _SUBLANE * _LANE * 4),    # per-block partials
    )

    partials = pl.pallas_call(
        kernel,
        out_shape=jax.ShapeDtypeStruct((nblocks, 1, _LANE), jnp.float32),
        grid=(nblocks,),
        in_specs=[
            pl.BlockSpec((tb, D), lambda i: (i, 0)),
            pl.BlockSpec((tb, D), lambda i: (i, 0)),
            pl.BlockSpec((1, tb), lambda i: (0, i)),
        ],
        out_specs=pl.BlockSpec((1, 1, _LANE), lambda i: (i, 0, 0)),
        compiler_params=pltpu.CompilerParams(
            # Every block is independent (per-block partial output), so the
            # single grid axis is fully parallel: v7x megacore shards it across
            # both TensorCores; on v5e/v6e it is simply the pipelined loop.
            dimension_semantics=("parallel",),
            vmem_limit_bytes=32 * 1024 * 1024,
        ),
        cost_estimate=cost,
    )(output1, output2, lbl)

    # Sum of per-block partials; both 0.5 factors are folded into this scale.
    return jnp.sum(partials[:, 0, 0]) * (0.5 / B)


def _reference(output1, output2, label, margin=20.0):
    diff = output1.astype(jnp.float32) - output2.astype(jnp.float32) + EPS
    d = jnp.sqrt(jnp.sum(diff * diff, axis=-1))
    lbl = label.astype(jnp.float32)
    return jnp.mean(0.5 * lbl * d ** 2 +
                    0.5 * (1.0 - lbl) * jnp.maximum(margin - d, 0.0) ** 2)


if __name__ == "__main__":
    key = jax.random.PRNGKey(0)
    k1, k2, k3 = jax.random.split(key, 3)

    # Small shapes consistent with the module: batch=8, hidden=32.
    B, D = 8, 32
    o1 = jax.random.normal(k1, (B, D), dtype=jnp.float32)
    o2 = jax.random.normal(k2, (B, D), dtype=jnp.float32)
    lab = jax.random.bernoulli(k3, 0.5, (B,)).astype(jnp.float32)

    loss = contrastive_loss(o1, o2, lab)
    jax.block_until_ready(loss)
    ref = _reference(o1, o2, lab)
    assert jnp.allclose(loss, ref, rtol=1e-4, atol=1e-4), (loss, ref)

    # Multi-block parallel grid + masked partial last block + lane-dense label.
    B2 = 300
    o1b = jax.random.normal(k1, (B2, D), dtype=jnp.float32)
    o2b = jax.random.normal(k2, (B2, D), dtype=jnp.float32)
    labb = jax.random.bernoulli(k3, 0.5, (B2,)).astype(jnp.float32)
    loss2 = contrastive_loss(o1b, o2b, labb, tile_batch=128)
    jax.block_until_ready(loss2)
    ref2 = _reference(o1b, o2b, labb)
    assert jnp.allclose(loss2, ref2, rtol=1e-4, atol=1e-4), (loss2, ref2)

    # Multi-block, evenly divisible batch (no mask code generated at all).
    B3 = 1024
    o1c = jax.random.normal(k1, (B3, D), dtype=jnp.float32)
    o2c = jax.random.normal(k2, (B3, D), dtype=jnp.float32)
    labc = jax.random.bernoulli(k3, 0.5, (B3,)).astype(jnp.float32)
    loss3 = contrastive_loss(o1c, o2c, labc, tile_batch=256)
    jax.block_until_ready(loss3)
    ref3 = _reference(o1c, o2c, labc)
    assert jnp.allclose(loss3, ref3, rtol=1e-4, atol=1e-4), (loss3, ref3)

    print("KERNEL_OK")
</pallas_src>

<mosaic_0001>
module attributes {stable_mosaic.version = 11 : i64} {
  func.func @_contrastive_kernel(%arg0: i32, %arg1: memref<8x32xf32, #tpu.memory_space<vmem>>, %arg2: memref<8x32xf32, #tpu.memory_space<vmem>>, %arg3: memref<1x8xf32, #tpu.memory_space<vmem>>, %arg4: memref<1x1x128xf32, #tpu.memory_space<vmem>>) attributes {dimension_semantics = [#tpu.dimension_semantics<parallel>], iteration_bounds = array<i64: 1>, scalar_prefetch = 0 : i64, scratch_operands = 0 : i64, tpu.core_type = #tpu.core_type<tc>, window_params = [{transform_indices = @transform_0, window_bounds = array<i64: 8, 32>}, {transform_indices = @transform_1, window_bounds = array<i64: 8, 32>}, {transform_indices = @transform_2, window_bounds = array<i64: 1, 8>}, {transform_indices = @transform_3, window_bounds = array<i64: 1, 1, 128>}]} {
    %c0 = arith.constant 0 : index
    %c0_0 = arith.constant 0 : index
    %0 = vector.load %arg1[%c0, %c0_0] : memref<8x32xf32, #tpu.memory_space<vmem>>, vector<8x32xf32>
    %c0_1 = arith.constant 0 : index
    %c0_2 = arith.constant 0 : index
    %1 = vector.load %arg2[%c0_1, %c0_2] : memref<8x32xf32, #tpu.memory_space<vmem>>, vector<8x32xf32>
    %c0_3 = arith.constant 0 : index
    %c0_4 = arith.constant 0 : index
    %2 = vector.load %arg3[%c0_3, %c0_4] : memref<1x8xf32, #tpu.memory_space<vmem>>, vector<1x8xf32>
    %3 = arith.subf %0, %1 : vector<8x32xf32>
    %cst = arith.constant 9.99999997E-7 : f32
    %4 = vector.broadcast %cst : f32 to vector<8x32xf32>
    %5 = arith.addf %3, %4 : vector<8x32xf32>
    %6 = arith.mulf %5, %5 : vector<8x32xf32>
    %cst_5 = arith.constant dense<0.000000e+00> : vector<8xf32>
    %7 = vector.multi_reduction <add>, %6, %cst_5 [1] : vector<8x32xf32> to vector<8xf32>
    %8 = vector.shape_cast %7 : vector<8xf32> to vector<8x1xf32>
    %9 = math.sqrt %8 : vector<8x1xf32>
    %cst_6 = arith.constant 2.000000e+01 : f32
    %10 = vector.broadcast %cst_6 : f32 to vector<8x1xf32>
    %11 = arith.subf %10, %9 : vector<8x1xf32>
    %cst_7 = arith.constant 0.000000e+00 : f32
    %12 = vector.broadcast %cst_7 : f32 to vector<8x1xf32>
    %13 = arith.maximumf %11, %12 : vector<8x1xf32>
    %14 = arith.mulf %13, %13 : vector<8x1xf32>
    %cst_8 = arith.constant dense<0.000000e+00> : vector<1x1xf32>
    %15 = tpu.matmul %2, %8, %cst_8 {dimension_numbers = #tpu.dot_dimension_numbers<[1], [0], [0], [1], [0, 0, 1, 1], [], []>} : vector<1x8xf32>, vector<8x1xf32>, vector<1x1xf32> -> vector<1x1xf32>
    %cst_9 = arith.constant 1.000000e+00 : f32
    %16 = vector.broadcast %cst_9 : f32 to vector<1x8xf32>
    %17 = arith.subf %16, %2 : vector<1x8xf32>
    %cst_10 = arith.constant dense<0.000000e+00> : vector<1x1xf32>
    %18 = tpu.matmul %17, %14, %cst_10 {dimension_numbers = #tpu.dot_dimension_numbers<[1], [0], [0], [1], [0, 0, 1, 1], [], []>} : vector<1x8xf32>, vector<8x1xf32>, vector<1x1xf32> -> vector<1x1xf32>
    %19 = arith.addf %15, %18 : vector<1x1xf32>
    %20 = vector.shape_cast %19 : vector<1x1xf32> to vector<1x1x1xf32>
    %21 = vector.shape_cast %20 : vector<1x1x1xf32> to vector<1x1x1xf32>
    %22 = vector.broadcast %21 : vector<1x1x1xf32> to vector<1x1x128xf32>
    %c0_11 = arith.constant 0 : index
    %c0_12 = arith.constant 0 : index
    %c0_13 = arith.constant 0 : index
    %23 = vector.load %arg4[%c0_11, %c0_12, %c0_13] : memref<1x1x128xf32, #tpu.memory_space<vmem>>, vector<1x1x128xf32>
    tpu.vector_store %arg4[%c0_11, %c0_12, %c0_13], %22 {strides = array<i32>} : memref<1x1x128xf32, #tpu.memory_space<vmem>>, vector<1x1x128xf32>,
    return
  }
  func.func @transform_0(%arg0: i32) -> (i32, i32) {
    %c0_i32 = arith.constant 0 : i32
    %c0_i32_0 = arith.constant 0 : i32
    return %arg0, %c0_i32 : i32, i32
  }
  func.func @transform_1(%arg0: i32) -> (i32, i32) {
    %c0_i32 = arith.constant 0 : i32
    %c0_i32_0 = arith.constant 0 : i32
    return %arg0, %c0_i32 : i32, i32
  }
  func.func @transform_2(%arg0: i32) -> (i32, i32) {
    %c0_i32 = arith.constant 0 : i32
    %c0_i32_0 = arith.constant 0 : i32
    return %c0_i32, %arg0 : i32, i32
  }
  func.func @transform_3(%arg0: i32) -> (i32, i32, i32) {
    %c0_i32 = arith.constant 0 : i32
    %c0_i32_0 = arith.constant 0 : i32
    %c0_i32_1 = arith.constant 0 : i32
    return %arg0, %c0_i32, %c0_i32_0 : i32, i32, i32
  }
}

</mosaic_0001>

<llo_original>
// kernel: tpu_custom_call.1
$region0: #{tpu_custom_call.1}
  #allocation0 [shape = 'u32[]', space=smem, size = 0x4, offset = 0x4, fixed_abs, tag = 'smem constant byte address 0x4 - core index']
  #allocation1 [shape = 'u32[144,128]{1,0:T(1,128)}', space=vmem, size = 0x12000, scoped, tag = 'internal scratch']
  %s0 = inlined_call_operand.hbm [shape: f32[8,32], index: 0, kind: input, shape index: {}]
  %s1 = inlined_call_operand.hbm [shape: f32[8,32], index: 1, kind: input, shape index: {}]
  %s2 = inlined_call_operand.vmem [shape: f32[1,8], index: 2, kind: input, shape index: {}]
  %s3 = inlined_call_operand.hbm [shape: f32[1,1,128], index: 3, kind: output, shape index: {}]
  %s4 = sld [smem:[#allocation0]]
  $region30: #{tpu_custom_call.1} parent=0
    _
  %s6 = ssub.s32 1, %s4
  %s7 = scalar_select 0, %s6, %s4
  $region1: #{tpu_custom_call.1} parent=0
    #allocation2 [shape = 'u8[4096]{0}', space=vmem, size = 0x1000, scoped, tag = 'input window, operand 0, single buffered']
    #allocation3 [shape = 's32[1]{0}', space=sflag, size = 0x4, scoped, tag = 'scoped memory for tpu_custom_call.1']
    #allocation4 [shape = 's32[1]{0}', space=sflag, size = 0x4, scoped, tag = 'scoped memory for tpu_custom_call.1']
    #allocation5 [shape = 'u8[4096]{0}', space=vmem, size = 0x1000, scoped, tag = 'input window, operand 1, single buffered']
    #allocation6 [shape = 's32[1]{0}', space=sflag, size = 0x4, scoped, tag = 'scoped memory for tpu_custom_call.1']
    #allocation7 [shape = 'u8[512]{0}', space=vmem, size = 0x400, scoped, tag = 'output window, operand 0, single buffered']
    %8 = vsyncpa [#allocation3], 0
    %9 = vsyncpa [#allocation6], 0
    %10 = vsyncpa [#allocation4], 0
    // Predicated region
    $region2: #{tpu_custom_call.1} parent=1 // pred_check
      _
    $region3: #{tpu_custom_call.1} parent=1 // pred_check_branch
      %12 = sbr.rel (0) target = $region5
    $region4: #{tpu_custom_call.1} parent=1 // pred_region
      %s14 = ssub.s32 128, 128
      %15 = vsyncadd [#allocation3], %s14
      %s17 = sshll.u32 [#allocation2], 4
      %s18 = int_to_ptr.vmem [resolvable:$true] %s17
      %20 = dma.hbm_to_vmem [thread:$0]  %s0, 128, %s18, [#allocation3]
    $region5: #{tpu_custom_call.1} parent=1 // pred_fallthru
      _
    // Predicated region
    $region6: #{tpu_custom_call.1} parent=1 // pred_check
      _
    $region7: #{tpu_custom_call.1} parent=1 // pred_check_branch
      %22 = sbr.rel (0) target = $region9
    $region8: #{tpu_custom_call.1} parent=1 // pred_region
      %s24 = ssub.s32 128, 128
      %25 = vsyncadd [#allocation6], %s24
      %s27 = sshll.u32 [#allocation5], 4
      %s28 = int_to_ptr.vmem [resolvable:$true] %s27
      %30 = dma.hbm_to_vmem [thread:$0]  %s1, 128, %s28, [#allocation6]
    $region9: #{tpu_custom_call.1} parent=1 // pred_fallthru
      _
    // Predicated region
    $region10: #{tpu_custom_call.1} parent=1 // pred_check
      _
    $region11: #{tpu_custom_call.1} parent=1 // pred_check_branch
      %32 = sbr.rel (0) target = $region13
    $region12: #{tpu_custom_call.1} parent=1 // pred_region
      _
    $region13: #{tpu_custom_call.1} parent=1 // pred_fallthru
      _
    // Predicated region
    $region14: #{tpu_custom_call.1} parent=1 // pred_check
      _
    $region15: #{tpu_custom_call.1} parent=1 // pred_check_branch
      %34 = sbr.rel (0) target = $region17
    $region16: #{tpu_custom_call.1} parent=1 // pred_region
      %35 = dma.done [#allocation3], 128
    $region17: #{tpu_custom_call.1} parent=1 // pred_fallthru
      _
    // Predicated region
    $region18: #{tpu_custom_call.1} parent=1 // pred_check
      _
    $region19: #{tpu_custom_call.1} parent=1 // pred_check_branch
      %37 = sbr.rel (0) target = $region21
    $region20: #{tpu_custom_call.1} parent=1 // pred_region
      %38 = dma.done [#allocation6], 128
    $region21: #{tpu_custom_call.1} parent=1 // pred_fallthru
      _
    %v39 = vld [vmem:[#allocation2] sm:$0xff]
    %v40 = vld [vmem:[#allocation5] sm:$0xff]
    %v41 = vld [vmem:[%s2] sm:$0x1]
    %v42 = vsub.f32 %v39, %v40
    %v43 = vadd.f32 %v42, 1e-06
    %v44 = vmul.f32 %v43, %v43
    %vm45 = vcmask 261120
    %v46 = vsel %vm45, %v44, 0.0
    %47 = vadd.xlane.f32.xlu0 %v46
    %v48 = vpop.xlane.xlu0 %47
    %v49 = vrsqrt.pop %v48
    %v50 = vmul.f32 %v48, %v49
    %vm51 = vcmp.eq.f32.partialorder %v48, inf
    %v52 = vsel %vm51, %v48, %v50
    %vm53 = vcmp.eq.f32.partialorder %v48, 0.0
    %v54 = vand.u32 %v48, 2147483648
    %v55 = vsel %vm53, %v54, %v52
    %v56 = vsub.f32 20.0, %v55
    %v57 = vmax.f32 %v56, 0.0
    %v58 = vmul.f32 %v57, %v57
    %v59 = vsub.f32 1.0, %v41
    %vm60 = vcmask 64512
    %v62 = vsel %vm60, %v59, 0
    %64 = vmatprep.subr.mxu0 0.0
    %65 = vmatpush1.msra.mxu0 0.0
    %66 = vmatprep.subr.mxu0 0.0
    %67 = vmatpush1.msra.mxu0 0.0
    %68 = vmatprep.subr.mxu0 0.0
    %69 = vmatpush1.msra.mxu0 0.0
    %70 = vmatprep.subr.mxu0 0.0
    %71 = vmatpush1.msra.mxu0 0.0
    %72 = vmatprep.subr.mxu0 0.0
    %73 = vmatpush1.msra.mxu0 0.0
    %74 = vmatprep.subr.mxu0 0.0
    %75 = vmatpush1.msra.mxu0 0.0
    %76 = vmatprep.subr.mxu0 0.0
    %77 = vmatpush1.msra.mxu0 0.0
    %78 = vmatprep.subr.mxu0 0.0
    %79 = vmatpush1.msra.mxu0 0.0
    %80 = vmatprep.subr.mxu0 0.0
    %81 = vmatpush1.msra.mxu0 0.0
    %82 = vmatprep.subr.mxu0 0.0
    %83 = vmatpush1.msra.mxu0 0.0
    %84 = vmatprep.subr.mxu0 0.0
    %85 = vmatpush1.msra.mxu0 0.0
    %86 = vmatprep.subr.mxu0 0.0
    %87 = vmatpush1.msra.mxu0 0.0
    %88 = vmatprep.subr.mxu0 0.0
    %89 = vmatpush1.msra.mxu0 0.0
    %90 = vmatprep.subr.mxu0 0.0
    %91 = vmatpush1.msra.mxu0 0.0
    %92 = vmatprep.subr.mxu0 0.0
    %93 = vmatpush1.msra.mxu0 0.0
    %94 = vmatprep.subr.mxu0 0.0
    %95 = vmatpush1.msra.mxu0 %v58
    %96 = vmatprep.subr.mxu0 0.0
    %97 = vmatpush2.msra.mxu0 0.0
    %98 = vmatprep.subr.mxu0 0.0
    %99 = vmatpush2.msra.mxu0 0.0
    %100 = vmatprep.subr.mxu0 0.0
    %101 = vmatpush2.msra.mxu0 0.0
    %102 = vmatprep.subr.mxu0 0.0
    %103 = vmatpush2.msra.mxu0 0.0
    %104 = vmatprep.subr.mxu0 0.0
    %105 = vmatpush2.msra.mxu0 0.0
    %106 = vmatprep.subr.mxu0 0.0
    %107 = vmatpush2.msra.mxu0 0.0
    %108 = vmatprep.subr.mxu0 0.0
    %109 = vmatpush2.msra.mxu0 0.0
    %110 = vmatprep.subr.mxu0 0.0
    %111 = vmatpush2.msra.mxu0 0.0
    %112 = vmatprep.subr.mxu0 0.0
    %113 = vmatpush2.msra.mxu0 0.0
    %114 = vmatprep.subr.mxu0 0.0
    %115 = vmatpush2.msra.mxu0 0.0
    %116 = vmatprep.subr.mxu0 0.0
    %117 = vmatpush2.msra.mxu0 0.0
    %118 = vmatprep.subr.mxu0 0.0
    %119 = vmatpush2.msra.mxu0 0.0
    %120 = vmatprep.subr.mxu0 0.0
    %121 = vmatpush2.msra.mxu0 0.0
    %122 = vmatprep.subr.mxu0 0.0
    %123 = vmatpush2.msra.mxu0 0.0
    %124 = vmatprep.subr.mxu0 0.0
    %125 = vmatpush2.msra.mxu0 0.0
    %126 = vmatprep.subr.mxu0 0.0
    %127 = vmatpush2.msra.mxu0 0.0
    %128 = vmatprep.mubr.f32.mxu0 0.0
    %129 = vmatmul.mubr.f32.gmra.mxu0 %v62
    %v130 = vpop.f32.mrf.mxu0
    %v131 = vadd.f32 0.0, %v130
    %v132 = vpop.f32.mrf.mxu0
    %133 = vdwg.mxu0
    %v135 = vsel %vm60, %v41, 0
    %137 = vmatprep.subr.mxu0 0.0
    %138 = vmatpush1.msra.mxu0 0.0
    %139 = vmatprep.subr.mxu0 0.0
    %140 = vmatpush1.msra.mxu0 0.0
    %141 = vmatprep.subr.mxu0 0.0
    %142 = vmatpush1.msra.mxu0 0.0
    %143 = vmatprep.subr.mxu0 0.0
    %144 = vmatpush1.msra.mxu0 0.0
    %145 = vmatprep.subr.mxu0 0.0
    %146 = vmatpush1.msra.mxu0 0.0
    %147 = vmatprep.subr.mxu0 0.0
    %148 = vmatpush1.msra.mxu0 0.0
    %149 = vmatprep.subr.mxu0 0.0
    %150 = vmatpush1.msra.mxu0 0.0
    %151 = vmatprep.subr.mxu0 0.0
    %152 = vmatpush1.msra.mxu0 0.0
    %153 = vmatprep.subr.mxu0 0.0
    %154 = vmatpush1.msra.mxu0 0.0
    %155 = vmatprep.subr.mxu0 0.0
    %156 = vmatpush1.msra.mxu0 0.0
    %157 = vmatprep.subr.mxu0 0.0
    %158 = vmatpush1.msra.mxu0 0.0
    %159 = vmatprep.subr.mxu0 0.0
    %160 = vmatpush1.msra.mxu0 0.0
    %161 = vmatprep.subr.mxu0 0.0
    %162 = vmatpush1.msra.mxu0 0.0
    %163 = vmatprep.subr.mxu0 0.0
    %164 = vmatpush1.msra.mxu0 0.0
    %165 = vmatprep.subr.mxu0 0.0
    %166 = vmatpush1.msra.mxu0 0.0
    %167 = vmatprep.subr.mxu0 0.0
    %168 = vmatpush1.msra.mxu0 %v48
    %169 = vmatprep.subr.mxu0 0.0
    %170 = vmatpush2.msra.mxu0 0.0
    %171 = vmatprep.subr.mxu0 0.0
    %172 = vmatpush2.msra.mxu0 0.0
    %173 = vmatprep.subr.mxu0 0.0
    %174 = vmatpush2.msra.mxu0 0.0
    %175 = vmatprep.subr.mxu0 0.0
    %176 = vmatpush2.msra.mxu0 0.0
    %177 = vmatprep.subr.mxu0 0.0
    %178 = vmatpush2.msra.mxu0 0.0
    %179 = vmatprep.subr.mxu0 0.0
    %180 = vmatpush2.msra.mxu0 0.0
    %181 = vmatprep.subr.mxu0 0.0
    %182 = vmatpush2.msra.mxu0 0.0
    %183 = vmatprep.subr.mxu0 0.0
    %184 = vmatpush2.msra.mxu0 0.0
    %185 = vmatprep.subr.mxu0 0.0
    %186 = vmatpush2.msra.mxu0 0.0
    %187 = vmatprep.subr.mxu0 0.0
    %188 = vmatpush2.msra.mxu0 0.0
    %189 = vmatprep.subr.mxu0 0.0
    %190 = vmatpush2.msra.mxu0 0.0
    %191 = vmatprep.subr.mxu0 0.0
    %192 = vmatpush2.msra.mxu0 0.0
    %193 = vmatprep.subr.mxu0 0.0
    %194 = vmatpush2.msra.mxu0 0.0
    %195 = vmatprep.subr.mxu0 0.0
    %196 = vmatpush2.msra.mxu0 0.0
    %197 = vmatprep.subr.mxu0 0.0
    %198 = vmatpush2.msra.mxu0 0.0
    %199 = vmatprep.subr.mxu0 0.0
    %200 = vmatpush2.msra.mxu0 0.0
    %201 = vmatprep.mubr.f32.mxu0 0.0
    %202 = vmatmul.mubr.f32.gmra.mxu0 %v135
    %v203 = vpop.f32.mrf.mxu0
    %v204 = vadd.f32 %v131, %v203
    %v205 = vpop.f32.mrf.mxu0
    %206 = vdwg.mxu0
    %208 = vset.pattern.permute.xlu0 0
    %209 = vperm.xlu0 %208, %v204
    %v210 = vpop.permute.xlu0 %209
    %212 = vst [vmem:[#allocation7] sm:$0x1] %v210
    // Predicated region
    $region22: #{tpu_custom_call.1} parent=1 // pred_check
      _
    $region23: #{tpu_custom_call.1} parent=1 // pred_check_branch
      %214 = sbr.rel (0) target = $region25
    $region24: #{tpu_custom_call.1} parent=1 // pred_region
      %s216 = ssub.s32 16, 16
      %217 = vsyncadd [#allocation4], %s216
      %s219 = sshll.u32 [#allocation7], 4
      %s220 = int_to_ptr.vmem [resolvable:$true] %s219
      %222 = dma.vmem_to_hbm [thread:$0]  %s220, 16, %s3, [#allocation4]
    $region25: #{tpu_custom_call.1} parent=1 // pred_fallthru
      _
    // Predicated region
    $region26: #{tpu_custom_call.1} parent=1 // pred_check
      _
    $region27: #{tpu_custom_call.1} parent=1 // pred_check_branch
      %224 = sbr.rel (0) target = $region29
    $region28: #{tpu_custom_call.1} parent=1 // pred_region
      %225 = dma.done [#allocation4], 16
    $region29: #{tpu_custom_call.1} parent=1 // pred_fallthru
      _
    %226 = vsyncpa [#allocation3], 1
    %227 = vsyncpa [#allocation6], 1
    %228 = vsyncpa [#allocation4], 1

</llo_original>
